<compile_context>
chip_gen: v7x
topology: tpu7x:2x2x1
jax: 0.10.0
libtpu: 0.0.40
codegen_flags: <defaults>
</compile_context>

<pallas_src>
import sys

import jax
import jax.numpy as jnp
from jax.experimental import pallas as pl
from jax.experimental.pallas import tpu as pltpu


def _energy_kernel(tok_ref, w1_ref, b1_ref, w2_ref, b2_ref, o_ref):
    # tok: (L, TILE_B) int32    token ids, batch on lanes
    # w1 : (C, H, L)   float32  laid out so w1[c, :, l] == W1[c*L + l, :]
    # b1 : (H, 1)      float32
    # w2 : (H, 1)      float32
    # b2 : (1, 1)      float32  (SMEM scalar)
    # o  : (1, TILE_B) float32  lane-dense energies
    C, H, L = w1_ref.shape
    tok = tok_ref[...]                                        # (L, TILE_B)

    # First layer == one-hot gather  h[:, b] = b1 + sum_l W1[tok[b,l]*L + l, :],
    # realized as C=4 tiny mask-matmuls (MXU, N lane-dense).
    h = b1_ref[...]                                           # (H, 1) -> broadcasts
    for c in range(C):                                        # static unroll, C == 4
        mask = (tok == c).astype(jnp.float32)                 # (L, TILE_B)
        h = h + jnp.dot(w1_ref[c], mask,
                        preferred_element_type=jnp.float32)   # (H, TILE_B)
    h = jnp.maximum(h, 0.0)

    # Second layer (H -> 1) on VPU/XLU: broadcast-mul + sublane reduce.
    e = jnp.sum(h * w2_ref[...], axis=0, keepdims=True)       # (1, TILE_B)
    o_ref[...] = (e + b2_ref[0, 0]).astype(o_ref.dtype)


def energy_pallas(tok_t, w1t, b1c, w2c, b2, *, tile_b=128):
    """tok_t: (L, B_pad) int32 with B_pad a multiple of tile_b -> (1, B_pad) f32."""
    L, b_pad = tok_t.shape
    C, H, _ = w1t.shape
    grid = (b_pad // tile_b,)

    cost = pl.CostEstimate(
        flops=2 * b_pad * C * L * H + 3 * b_pad * H,
        transcendentals=0,
        bytes_accessed=(tok_t.size * 4 + w1t.size * 4 + b1c.size * 4
                        + w2c.size * 4 + b2.size * 4 + b_pad * 4),
    )

    return pl.pallas_call(
        _energy_kernel,
        out_shape=jax.ShapeDtypeStruct((1, b_pad), jnp.float32),
        grid=grid,
        in_specs=[
            pl.BlockSpec((L, tile_b), lambda g: (0, g)),        # token stream (pipelined)
            pl.BlockSpec((C, H, L), lambda g: (0, 0, 0)),       # resident weights
            pl.BlockSpec((H, 1), lambda g: (0, 0)),             # resident b1
            pl.BlockSpec((H, 1), lambda g: (0, 0)),             # resident w2
            pl.BlockSpec(memory_space=pltpu.MemorySpace.SMEM),  # b2 scalar in SMEM
        ],
        out_specs=pl.BlockSpec((1, tile_b), lambda g: (0, g)),  # lane-dense output
        compiler_params=pltpu.CompilerParams(
            dimension_semantics=("parallel",),                  # megacore on v7x
        ),
        cost_estimate=cost,
    )(tok_t, w1t, b1c, w2c, b2)


class BaseEnergyJAX:
    """Mirrors BaseEnergy.forward: energy_calc(x) + penalty(x) when available."""

    def __init__(self, w1, b1, w2, b2, n_channels=4, tile_b=128):
        # Synthetic "model": energy(x) = relu(flatten(x) @ w1 + b1) @ w2 + b2.
        D, H = w1.shape
        C = n_channels
        L = D // C
        assert C * L == D
        self.C, self.L, self.H = C, L, H
        self.tile_b = tile_b
        # Re-lay out weights once (not per call) into kernel-friendly shapes.
        self.w1t = jnp.transpose(w1.reshape(C, L, H), (0, 2, 1)).astype(jnp.float32)  # (C,H,L)
        self.b1c = jnp.reshape(b1, (H, 1)).astype(jnp.float32)
        self.w2c = jnp.reshape(w2, (H, 1)).astype(jnp.float32)
        self.b2 = jnp.reshape(b2, (1, 1)).astype(jnp.float32)
        # TODO(synk): at real model sizes cast w1t / masks to bfloat16 for the v6e/v7x
        # MXU fast path (keep f32 accumulation); f32 kept here for an exact check.

    def energy_from_tokens(self, tokens):
        # tokens: (B, L) int32 token ids in [0, C)
        B, L = tokens.shape
        tile_b = self.tile_b
        b_pad = ((B + tile_b - 1) // tile_b) * tile_b
        tok_t = jnp.zeros((L, b_pad), jnp.int32).at[:, :B].set(
            tokens.T.astype(jnp.int32))
        e = energy_pallas(tok_t, self.w1t, self.b1c, self.w2c, self.b2,
                          tile_b=tile_b)
        return e.reshape(-1)[:B]                                # (B,)

    def energy_calc(self, x_in):
        # x_in: (B, C, L) one-hot sequences (NCL, as torch.flatten(x, 1) expects).
        # The kernel consumes token ids; argmax over the channel axis is exact for
        # one-hot inputs and avoids streaming the dense one-hot through HBM.
        # TODO(synk): relaxed (non-one-hot) x_in would need a dense-matmul path.
        tokens = jnp.argmax(x_in, axis=1).astype(jnp.int32)     # (B, L)
        return self.energy_from_tokens(tokens)

    def forward(self, x_in):
        hook = self.energy_calc(x_in)
        try:
            pen = self.penalty(x_in)  # not defined on the base class
            hook = hook + pen
        except AttributeError:
            if not getattr(self, "you_have_been_warned", False):
                print("Penalty not implemented", file=sys.stderr)
                self.you_have_been_warned = True
        return hook

    __call__ = forward


if __name__ == "__main__":
    key = jax.random.PRNGKey(0)
    k_x, k_w1, k_b1, k_w2, k_b2 = jax.random.split(key, 5)

    B, C, L, H = 8, 4, 16, 128          # H=128 keeps operands lane-aligned
    D = C * L

    # deterministic synthetic "model" parameters
    w1 = jax.random.normal(k_w1, (D, H), jnp.float32) * 0.1
    b1 = jax.random.normal(k_b1, (1, H), jnp.float32) * 0.1
    w2 = jax.random.normal(k_w2, (H, 1), jnp.float32) * 0.1
    b2 = jax.random.normal(k_b2, (1, 1), jnp.float32) * 0.1

    # deterministic one-hot sequence batch, layout NCL
    tokens = jax.random.randint(k_x, (B, L), 0, C)
    x_in = jax.nn.one_hot(tokens, C, dtype=jnp.float32).transpose(0, 2, 1)  # (B, C, L)

    energy_fn = BaseEnergyJAX(w1, b1, w2, b2, n_channels=C)
    out = energy_fn(x_in)
    out = jax.block_until_ready(out)

    # reference check in plain JAX (dense one-hot formulation, full precision)
    x_flat = x_in.reshape(B, -1)
    h_ref = jnp.maximum(
        jnp.dot(x_flat, w1, precision=jax.lax.Precision.HIGHEST) + b1, 0.0)
    ref = (jnp.dot(h_ref, w2, precision=jax.lax.Precision.HIGHEST) + b2)[:, 0]

    assert out.shape == (B,)
    assert jnp.allclose(out, ref, atol=1e-4, rtol=1e-4), (out, ref)

    # TODO(synk): BaseEnergy.energy_calc is abstract (raises NotImplementedError);
    # a deterministic synthetic linear-ReLU-linear scorer stands in for self.model.
    print("KERNEL_OK")
</pallas_src>

<mosaic_0001>
module attributes {stable_mosaic.version = 11 : i64} {
  func.func @_energy_kernel(%arg0: i32, %arg1: memref<16x128xi32, #tpu.memory_space<vmem>>, %arg2: memref<4x128x16xf32, #tpu.memory_space<vmem>>, %arg3: memref<128x1xf32, #tpu.memory_space<vmem>>, %arg4: memref<128x1xf32, #tpu.memory_space<vmem>>, %arg5: memref<1x1xf32, #tpu.memory_space<smem>>, %arg6: memref<1x128xf32, #tpu.memory_space<vmem>>) attributes {dimension_semantics = [#tpu.dimension_semantics<parallel>], iteration_bounds = array<i64: 1>, scalar_prefetch = 0 : i64, scratch_operands = 0 : i64, tpu.core_type = #tpu.core_type<tc>, window_params = [{transform_indices = @transform_0, window_bounds = array<i64: 16, 128>}, {pipeline_mode = #tpu.pipeline_mode<synchronous>, transform_indices = @transform_1, window_bounds = array<i64: 4, 128, 16>}, {pipeline_mode = #tpu.pipeline_mode<synchronous>, transform_indices = @transform_2, window_bounds = array<i64: 128, 1>}, {pipeline_mode = #tpu.pipeline_mode<synchronous>, transform_indices = @transform_3, window_bounds = array<i64: 128, 1>}, {transform_indices = @transform_4, window_bounds = array<i64: 1, 1>}, {transform_indices = @transform_5, window_bounds = array<i64: 1, 128>}]} {
    %c0 = arith.constant 0 : index
    %c0_0 = arith.constant 0 : index
    %0 = vector.load %arg1[%c0, %c0_0] : memref<16x128xi32, #tpu.memory_space<vmem>>, vector<16x128xi32>
    %c0_1 = arith.constant 0 : index
    %c0_2 = arith.constant 0 : index
    %1 = vector.load %arg3[%c0_1, %c0_2] : memref<128x1xf32, #tpu.memory_space<vmem>>, vector<128x1xf32>
    %c0_i32 = arith.constant 0 : i32
    %2 = vector.broadcast %c0_i32 : i32 to vector<16x128xi32>
    %3 = arith.cmpi eq, %0, %2 : vector<16x128xi32>
    %4 = arith.extui %3 : vector<16x128xi1> to vector<16x128xi32>
    %5 = arith.sitofp %4 : vector<16x128xi32> to vector<16x128xf32>
    %c0_3 = arith.constant 0 : index
    %c0_4 = arith.constant 0 : index
    %c0_5 = arith.constant 0 : index
    %6 = vector.load %arg2[%c0_3, %c0_4, %c0_5] : memref<4x128x16xf32, #tpu.memory_space<vmem>>, vector<1x128x16xf32>
    %7 = vector.shape_cast %6 : vector<1x128x16xf32> to vector<128x16xf32>
    %cst = arith.constant dense<0.000000e+00> : vector<128x128xf32>
    %8 = tpu.matmul %7, %5, %cst {dimension_numbers = #tpu.dot_dimension_numbers<[1], [0], [0], [1], [0, 0, 1, 1], [], []>} : vector<128x16xf32>, vector<16x128xf32>, vector<128x128xf32> -> vector<128x128xf32>
    %9 = vector.broadcast %1 : vector<128x1xf32> to vector<128x128xf32>
    %10 = arith.addf %9, %8 : vector<128x128xf32>
    %c1_i32 = arith.constant 1 : i32
    %11 = vector.broadcast %c1_i32 : i32 to vector<16x128xi32>
    %12 = arith.cmpi eq, %0, %11 : vector<16x128xi32>
    %13 = arith.extui %12 : vector<16x128xi1> to vector<16x128xi32>
    %14 = arith.sitofp %13 : vector<16x128xi32> to vector<16x128xf32>
    %c1 = arith.constant 1 : index
    %c0_6 = arith.constant 0 : index
    %c0_7 = arith.constant 0 : index
    %15 = vector.load %arg2[%c1, %c0_6, %c0_7] : memref<4x128x16xf32, #tpu.memory_space<vmem>>, vector<1x128x16xf32>
    %16 = vector.shape_cast %15 : vector<1x128x16xf32> to vector<128x16xf32>
    %cst_8 = arith.constant dense<0.000000e+00> : vector<128x128xf32>
    %17 = tpu.matmul %16, %14, %cst_8 {dimension_numbers = #tpu.dot_dimension_numbers<[1], [0], [0], [1], [0, 0, 1, 1], [], []>} : vector<128x16xf32>, vector<16x128xf32>, vector<128x128xf32> -> vector<128x128xf32>
    %18 = arith.addf %10, %17 : vector<128x128xf32>
    %c2_i32 = arith.constant 2 : i32
    %19 = vector.broadcast %c2_i32 : i32 to vector<16x128xi32>
    %20 = arith.cmpi eq, %0, %19 : vector<16x128xi32>
    %21 = arith.extui %20 : vector<16x128xi1> to vector<16x128xi32>
    %22 = arith.sitofp %21 : vector<16x128xi32> to vector<16x128xf32>
    %c2 = arith.constant 2 : index
    %c0_9 = arith.constant 0 : index
    %c0_10 = arith.constant 0 : index
    %23 = vector.load %arg2[%c2, %c0_9, %c0_10] : memref<4x128x16xf32, #tpu.memory_space<vmem>>, vector<1x128x16xf32>
    %24 = vector.shape_cast %23 : vector<1x128x16xf32> to vector<128x16xf32>
    %cst_11 = arith.constant dense<0.000000e+00> : vector<128x128xf32>
    %25 = tpu.matmul %24, %22, %cst_11 {dimension_numbers = #tpu.dot_dimension_numbers<[1], [0], [0], [1], [0, 0, 1, 1], [], []>} : vector<128x16xf32>, vector<16x128xf32>, vector<128x128xf32> -> vector<128x128xf32>
    %26 = arith.addf %18, %25 : vector<128x128xf32>
    %c3_i32 = arith.constant 3 : i32
    %27 = vector.broadcast %c3_i32 : i32 to vector<16x128xi32>
    %28 = arith.cmpi eq, %0, %27 : vector<16x128xi32>
    %29 = arith.extui %28 : vector<16x128xi1> to vector<16x128xi32>
    %30 = arith.sitofp %29 : vector<16x128xi32> to vector<16x128xf32>
    %c3 = arith.constant 3 : index
    %c0_12 = arith.constant 0 : index
    %c0_13 = arith.constant 0 : index
    %31 = vector.load %arg2[%c3, %c0_12, %c0_13] : memref<4x128x16xf32, #tpu.memory_space<vmem>>, vector<1x128x16xf32>
    %32 = vector.shape_cast %31 : vector<1x128x16xf32> to vector<128x16xf32>
    %cst_14 = arith.constant dense<0.000000e+00> : vector<128x128xf32>
    %33 = tpu.matmul %32, %30, %cst_14 {dimension_numbers = #tpu.dot_dimension_numbers<[1], [0], [0], [1], [0, 0, 1, 1], [], []>} : vector<128x16xf32>, vector<16x128xf32>, vector<128x128xf32> -> vector<128x128xf32>
    %34 = arith.addf %26, %33 : vector<128x128xf32>
    %cst_15 = arith.constant 0.000000e+00 : f32
    %35 = vector.broadcast %cst_15 : f32 to vector<128x128xf32>
    %36 = arith.maximumf %34, %35 : vector<128x128xf32>
    %c0_16 = arith.constant 0 : index
    %c0_17 = arith.constant 0 : index
    %37 = vector.load %arg4[%c0_16, %c0_17] : memref<128x1xf32, #tpu.memory_space<vmem>>, vector<128x1xf32>
    %38 = vector.broadcast %37 : vector<128x1xf32> to vector<128x128xf32>
    %39 = arith.mulf %36, %38 : vector<128x128xf32>
    %cst_18 = arith.constant dense<0.000000e+00> : vector<128xf32>
    %40 = vector.multi_reduction <add>, %39, %cst_18 [0] : vector<128x128xf32> to vector<128xf32>
    %41 = vector.shape_cast %40 : vector<128xf32> to vector<1x128xf32>
    %c0_19 = arith.constant 0 : index
    %c0_20 = arith.constant 0 : index
    %42 = memref.load %arg5[%c0_19, %c0_20] : memref<1x1xf32, #tpu.memory_space<smem>>
    %43 = vector.broadcast %42 : f32 to vector<1x128xf32>
    %44 = arith.addf %41, %43 : vector<1x128xf32>
    %c0_21 = arith.constant 0 : index
    %c0_22 = arith.constant 0 : index
    %45 = vector.load %arg6[%c0_21, %c0_22] : memref<1x128xf32, #tpu.memory_space<vmem>>, vector<1x128xf32>
    tpu.vector_store %arg6[%c0_21, %c0_22], %44 {strides = array<i32>} : memref<1x128xf32, #tpu.memory_space<vmem>>, vector<1x128xf32>,
    return
  }
  func.func @transform_0(%arg0: i32) -> (i32, i32) {
    %c0_i32 = arith.constant 0 : i32
    %c0_i32_0 = arith.constant 0 : i32
    return %c0_i32, %arg0 : i32, i32
  }
  func.func @transform_1(%arg0: i32) -> (i32, i32, i32) {
    %c0_i32 = arith.constant 0 : i32
    %c0_i32_0 = arith.constant 0 : i32
    %c0_i32_1 = arith.constant 0 : i32
    %c0_i32_2 = arith.constant 0 : i32
    return %c0_i32, %c0_i32_0, %c0_i32_1 : i32, i32, i32
  }
  func.func @transform_2(%arg0: i32) -> (i32, i32) {
    %c0_i32 = arith.constant 0 : i32
    %c0_i32_0 = arith.constant 0 : i32
    %c0_i32_1 = arith.constant 0 : i32
    return %c0_i32, %c0_i32_0 : i32, i32
  }
  func.func @transform_3(%arg0: i32) -> (i32, i32) {
    %c0_i32 = arith.constant 0 : i32
    %c0_i32_0 = arith.constant 0 : i32
    %c0_i32_1 = arith.constant 0 : i32
    return %c0_i32, %c0_i32_0 : i32, i32
  }
  func.func @transform_4(%arg0: i32) -> (i32, i32) {
    %c0_i32 = arith.constant 0 : i32
    %c0_i32_0 = arith.constant 0 : i32
    %c0_i32_1 = arith.constant 0 : i32
    return %c0_i32, %c0_i32_0 : i32, i32
  }
  func.func @transform_5(%arg0: i32) -> (i32, i32) {
    %c0_i32 = arith.constant 0 : i32
    %c0_i32_0 = arith.constant 0 : i32
    return %c0_i32, %arg0 : i32, i32
  }
}

</mosaic_0001>

<llo_original>
// kernel: tpu_custom_call.1
$region0: #{tpu_custom_call.1}
  #allocation0 [shape = 'u32[]', space=smem, size = 0x4, offset = 0x4, fixed_abs, tag = 'smem constant byte address 0x4 - core index']
  #allocation1 [shape = 'u32[144,128]{1,0:T(1,128)}', space=vmem, size = 0x12000, scoped, tag = 'internal scratch']
  #allocation2 [shape = 'f32[1,1]{1,0:T(1,128)S(6)}', space=smem, size = 0x200, scoped, tag = 'scoped memory for tpu_custom_call.1']
  %s0 = inlined_call_operand.vmem [shape: s32[16,128], index: 0, kind: input, shape index: {}]
  %s1 = inlined_call_operand.vmem [shape: f32[4,128,16], index: 1, kind: input, shape index: {}]
  %s2 = inlined_call_operand.vmem [shape: f32[128,1], index: 2, kind: input, shape index: {}]
  %s3 = inlined_call_operand.vmem [shape: f32[128,1], index: 3, kind: input, shape index: {}]
  %s4 = inlined_call_operand.<no memory space> [shape: f32[1,1], index: 4, kind: input, shape index: {}]
  %s5 = inlined_call_operand.hbm [shape: f32[1,128], index: 5, kind: output, shape index: {}]
  %s6 = sld [smem:[#allocation0]]
  $region30: #{tpu_custom_call.1} parent=0
    _
  %s8 = ssub.s32 1, %s6
  %s9 = scalar_select 0, %s8, %s6
  %10 = sst [smem:[#allocation2]] %s4
  $region1: #{tpu_custom_call.1} parent=0
    #allocation3 [shape = 'u8[512]{0}', space=vmem, size = 0x400, scoped, tag = 'output window, operand 0, single buffered']
    #allocation4 [shape = 's32[1]{0}', space=sflag, size = 0x4, scoped, tag = 'scoped memory for tpu_custom_call.1']
    %11 = vsyncpa [#allocation4], 0
    // Predicated region
    $region2: #{tpu_custom_call.1} parent=1 // pred_check
      _
    $region3: #{tpu_custom_call.1} parent=1 // pred_check_branch
      %13 = sbr.rel (0) target = $region5
    $region4: #{tpu_custom_call.1} parent=1 // pred_region
      _
    $region5: #{tpu_custom_call.1} parent=1 // pred_fallthru
      _
    // Predicated region
    $region6: #{tpu_custom_call.1} parent=1 // pred_check
      _
    $region7: #{tpu_custom_call.1} parent=1 // pred_check_branch
      %15 = sbr.rel (0) target = $region9
    $region8: #{tpu_custom_call.1} parent=1 // pred_region
      _
    $region9: #{tpu_custom_call.1} parent=1 // pred_fallthru
      _
    // Predicated region
    $region10: #{tpu_custom_call.1} parent=1 // pred_check
      _
    $region11: #{tpu_custom_call.1} parent=1 // pred_check_branch
      %17 = sbr.rel (0) target = $region13
    $region12: #{tpu_custom_call.1} parent=1 // pred_region
      _
    $region13: #{tpu_custom_call.1} parent=1 // pred_fallthru
      _
    // Predicated region
    $region14: #{tpu_custom_call.1} parent=1 // pred_check
      _
    $region15: #{tpu_custom_call.1} parent=1 // pred_check_branch
      %19 = sbr.rel (0) target = $region17
    $region16: #{tpu_custom_call.1} parent=1 // pred_region
      _
    $region17: #{tpu_custom_call.1} parent=1 // pred_fallthru
      _
    // Predicated region
    $region18: #{tpu_custom_call.1} parent=1 // pred_check
      _
    $region19: #{tpu_custom_call.1} parent=1 // pred_check_branch
      %21 = sbr.rel (0) target = $region21
    $region20: #{tpu_custom_call.1} parent=1 // pred_region
      _
    $region21: #{tpu_custom_call.1} parent=1 // pred_fallthru
      _
    %v22 = vld [vmem:[%s0] sm:$0xff]
    %v23 = vld [vmem:[%s0 + $0x8] sm:$0xff]
    %v24 = vld [vmem:[%s2] sm:$0xff]
    %v25 = vld [vmem:[%s2 + $0x8] sm:$0xff]
    %v26 = vld [vmem:[%s2 + $0x10] sm:$0xff]
    %v27 = vld [vmem:[%s2 + $0x18] sm:$0xff]
    %v28 = vld [vmem:[%s2 + $0x20] sm:$0xff]
    %v29 = vld [vmem:[%s2 + $0x28] sm:$0xff]
    %v30 = vld [vmem:[%s2 + $0x30] sm:$0xff]
    %v31 = vld [vmem:[%s2 + $0x38] sm:$0xff]
    %v32 = vld [vmem:[%s2 + $0x40] sm:$0xff]
    %v33 = vld [vmem:[%s2 + $0x48] sm:$0xff]
    %v34 = vld [vmem:[%s2 + $0x50] sm:$0xff]
    %v35 = vld [vmem:[%s2 + $0x58] sm:$0xff]
    %v36 = vld [vmem:[%s2 + $0x60] sm:$0xff]
    %v37 = vld [vmem:[%s2 + $0x68] sm:$0xff]
    %v38 = vld [vmem:[%s2 + $0x70] sm:$0xff]
    %v39 = vld [vmem:[%s2 + $0x78] sm:$0xff]
    %vm40 = vcmp.eq.s32.totalorder %v22, 0
    %vm41 = vcmp.eq.s32.totalorder %v23, 0
    %v42 = vsel %vm40, 1, 0
    %v43 = vsel %vm41, 1, 0
    %v44 = vcvt.s32.f32 %v42
    %v45 = vcvt.s32.f32 %v43
    %v46 = vld [vmem:[%s1] sm:$0xff]
    %v47 = vld [vmem:[%s1 + $0x8] sm:$0xff]
    %v48 = vld [vmem:[%s1 + $0x10] sm:$0xff]
    %v49 = vld [vmem:[%s1 + $0x18] sm:$0xff]
    %v50 = vld [vmem:[%s1 + $0x20] sm:$0xff]
    %v51 = vld [vmem:[%s1 + $0x28] sm:$0xff]
    %v52 = vld [vmem:[%s1 + $0x30] sm:$0xff]
    %v53 = vld [vmem:[%s1 + $0x38] sm:$0xff]
    %v54 = vld [vmem:[%s1 + $0x40] sm:$0xff]
    %v55 = vld [vmem:[%s1 + $0x48] sm:$0xff]
    %v56 = vld [vmem:[%s1 + $0x50] sm:$0xff]
    %v57 = vld [vmem:[%s1 + $0x58] sm:$0xff]
    %v58 = vld [vmem:[%s1 + $0x60] sm:$0xff]
    %v59 = vld [vmem:[%s1 + $0x68] sm:$0xff]
    %v60 = vld [vmem:[%s1 + $0x70] sm:$0xff]
    %v61 = vld [vmem:[%s1 + $0x78] sm:$0xff]
    %vm62 = vcmask 130048
    %v64 = vsel %vm62, %v46, 0
    %v67 = vsel %vm62, %v47, 0
    %v70 = vsel %vm62, %v48, 0
    %v73 = vsel %vm62, %v49, 0
    %v76 = vsel %vm62, %v50, 0
    %v79 = vsel %vm62, %v51, 0
    %v82 = vsel %vm62, %v52, 0
    %v85 = vsel %vm62, %v53, 0
    %v88 = vsel %vm62, %v54, 0
    %v91 = vsel %vm62, %v55, 0
    %v94 = vsel %vm62, %v56, 0
    %v97 = vsel %vm62, %v57, 0
    %v100 = vsel %vm62, %v58, 0
    %v103 = vsel %vm62, %v59, 0
    %v106 = vsel %vm62, %v60, 0
    %v109 = vsel %vm62, %v61, 0
    %111 = vmatprep.subr.mxu0 0.0
    %112 = vmatpush1.msra.mxu0 %v44
    %113 = vmatprep.subr.mxu0 0.0
    %114 = vmatpush1.msra.mxu0 %v45
    %115 = vmatprep.subr.mxu0 0.0
    %116 = vmatpush1.msra.mxu0 0.0
    %117 = vmatprep.subr.mxu0 0.0
    %118 = vmatpush1.msra.mxu0 0.0
    %119 = vmatprep.subr.mxu0 0.0
    %120 = vmatpush1.msra.mxu0 0.0
    %121 = vmatprep.subr.mxu0 0.0
    %122 = vmatpush1.msra.mxu0 0.0
    %123 = vmatprep.subr.mxu0 0.0
    %124 = vmatpush1.msra.mxu0 0.0
    %125 = vmatprep.subr.mxu0 0.0
    %126 = vmatpush1.msra.mxu0 0.0
    %127 = vmatprep.subr.mxu0 0.0
    %128 = vmatpush1.msra.mxu0 0.0
    %129 = vmatprep.subr.mxu0 0.0
    %130 = vmatpush1.msra.mxu0 0.0
    %131 = vmatprep.subr.mxu0 0.0
    %132 = vmatpush1.msra.mxu0 0.0
    %133 = vmatprep.subr.mxu0 0.0
    %134 = vmatpush1.msra.mxu0 0.0
    %135 = vmatprep.subr.mxu0 0.0
    %136 = vmatpush1.msra.mxu0 0.0
    %137 = vmatprep.subr.mxu0 0.0
    %138 = vmatpush1.msra.mxu0 0.0
    %139 = vmatprep.subr.mxu0 0.0
    %140 = vmatpush1.msra.mxu0 0.0
    %141 = vmatprep.subr.mxu0 0.0
    %142 = vmatpush1.msra.mxu0 0.0
    %143 = vmatprep.subr.mxu0 0.0
    %144 = vmatpush1.msra.mxu0 0.0
    %145 = vmatprep.subr.mxu0 0.0
    %146 = vmatpush1.msra.mxu0 0.0
    %147 = vmatprep.subr.mxu0 0.0
    %148 = vmatpush1.msra.mxu0 0.0
    %149 = vmatprep.subr.mxu0 0.0
    %150 = vmatpush1.msra.mxu0 0.0
    %151 = vmatprep.subr.mxu0 0.0
    %152 = vmatpush1.msra.mxu0 0.0
    %153 = vmatprep.subr.mxu0 0.0
    %154 = vmatpush1.msra.mxu0 0.0
    %155 = vmatprep.subr.mxu0 0.0
    %156 = vmatpush1.msra.mxu0 0.0
    %157 = vmatprep.subr.mxu0 0.0
    %158 = vmatpush1.msra.mxu0 0.0
    %159 = vmatprep.subr.mxu0 0.0
    %160 = vmatpush1.msra.mxu0 0.0
    %161 = vmatprep.subr.mxu0 0.0
    %162 = vmatpush1.msra.mxu0 0.0
    %163 = vmatprep.subr.mxu0 0.0
    %164 = vmatpush1.msra.mxu0 0.0
    %165 = vmatprep.subr.mxu0 0.0
    %166 = vmatpush1.msra.mxu0 0.0
    %167 = vmatprep.subr.mxu0 0.0
    %168 = vmatpush1.msra.mxu0 0.0
    %169 = vmatprep.subr.mxu0 0.0
    %170 = vmatpush1.msra.mxu0 0.0
    %171 = vmatprep.subr.mxu0 0.0
    %172 = vmatpush1.msra.mxu0 0.0
    %173 = vmatprep.subr.mxu0 0.0
    %174 = vmatpush1.msra.mxu0 0.0
    %175 = vmatprep.mubr.f32.mxu0 0.0
    %176 = vmatmul.mubr.f32.gmra.mrb[0].mxu0 %v64
    %v177 = vpop.f32.mrb[0].mxu0
    %v178 = vadd.f32 0.0, %v177
    %v179 = vpop.f32.mrb[0].mxu0
    %180 = vmatprep.mubr.f32.mxu0 0.0
    %181 = vmatmul.mubr.f32.gmra.mrb[0].mxu0 %v67
    %v182 = vpop.f32.mrb[0].mxu0
    %v183 = vadd.f32 0.0, %v182
    %v184 = vpop.f32.mrb[0].mxu0
    %185 = vmatprep.mubr.f32.mxu0 0.0
    %186 = vmatmul.mubr.f32.gmra.mrb[0].mxu0 %v70
    %v187 = vpop.f32.mrb[0].mxu0
    %v188 = vadd.f32 0.0, %v187
    %v189 = vpop.f32.mrb[0].mxu0
    %190 = vmatprep.mubr.f32.mxu0 0.0
    %191 = vmatmul.mubr.f32.gmra.mrb[0].mxu0 %v73
    %v192 = vpop.f32.mrb[0].mxu0
    %v193 = vadd.f32 0.0, %v192
    %v194 = vpop.f32.mrb[0].mxu0
    %195 = vmatprep.mubr.f32.mxu0 0.0
    %196 = vmatmul.mubr.f32.gmra.mrb[0].mxu0 %v76
    %v197 = vpop.f32.mrb[0].mxu0
    %v198 = vadd.f32 0.0, %v197
    %v199 = vpop.f32.mrb[0].mxu0
    %200 = vmatprep.mubr.f32.mxu0 0.0
    %201 = vmatmul.mubr.f32.gmra.mrb[0].mxu0 %v79
    %v202 = vpop.f32.mrb[0].mxu0
    %v203 = vadd.f32 0.0, %v202
    %v204 = vpop.f32.mrb[0].mxu0
    %205 = vmatprep.mubr.f32.mxu0 0.0
    %206 = vmatmul.mubr.f32.gmra.mrb[0].mxu0 %v82
    %v207 = vpop.f32.mrb[0].mxu0
    %v208 = vadd.f32 0.0, %v207
    %v209 = vpop.f32.mrb[0].mxu0
    %210 = vmatprep.mubr.f32.mxu0 0.0
    %211 = vmatmul.mubr.f32.gmra.mrb[0].mxu0 %v85
    %v212 = vpop.f32.mrb[0].mxu0
    %v213 = vadd.f32 0.0, %v212
    %v214 = vpop.f32.mrb[0].mxu0
    %215 = vmatprep.mubr.f32.mxu0 0.0
    %216 = vmatmul.mubr.f32.gmra.mrb[0].mxu0 %v88
    %v217 = vpop.f32.mrb[0].mxu0
    %v218 = vadd.f32 0.0, %v217
    %v219 = vpop.f32.mrb[0].mxu0
    %220 = vmatprep.mubr.f32.mxu0 0.0
    %221 = vmatmul.mubr.f32.gmra.mrb[0].mxu0 %v91
    %v222 = vpop.f32.mrb[0].mxu0
    %v223 = vadd.f32 0.0, %v222
    %v224 = vpop.f32.mrb[0].mxu0
    %225 = vmatprep.mubr.f32.mxu0 0.0
    %226 = vmatmul.mubr.f32.gmra.mrb[0].mxu0 %v94
    %v227 = vpop.f32.mrb[0].mxu0
    %v228 = vadd.f32 0.0, %v227
    %v229 = vpop.f32.mrb[0].mxu0
    %230 = vmatprep.mubr.f32.mxu0 0.0
    %231 = vmatmul.mubr.f32.gmra.mrb[0].mxu0 %v97
    %v232 = vpop.f32.mrb[0].mxu0
    %v233 = vadd.f32 0.0, %v232
    %v234 = vpop.f32.mrb[0].mxu0
    %235 = vmatprep.mubr.f32.mxu0 0.0
    %236 = vmatmul.mubr.f32.gmra.mrb[0].mxu0 %v100
    %v237 = vpop.f32.mrb[0].mxu0
    %v238 = vadd.f32 0.0, %v237
    %v239 = vpop.f32.mrb[0].mxu0
    %240 = vmatprep.mubr.f32.mxu0 0.0
    %241 = vmatmul.mubr.f32.gmra.mrb[0].mxu0 %v103
    %v242 = vpop.f32.mrb[0].mxu0
    %v243 = vadd.f32 0.0, %v242
    %v244 = vpop.f32.mrb[0].mxu0
    %245 = vmatprep.mubr.f32.mxu0 0.0
    %246 = vmatmul.mubr.f32.gmra.mrb[0].mxu0 %v106
    %v247 = vpop.f32.mrb[0].mxu0
    %v248 = vadd.f32 0.0, %v247
    %v249 = vpop.f32.mrb[0].mxu0
    %250 = vmatprep.mubr.f32.mxu0 0.0
    %251 = vmatmul.mubr.f32.gmra.mrb[0].mxu0 %v109
    %v252 = vpop.f32.mrb[0].mxu0
    %v253 = vadd.f32 0.0, %v252
    %v254 = vpop.f32.mrb[0].mxu0
    %255 = vdwg.mxu0
    %257 = vset.pattern.permute.xlu0 0
    %258 = vperm.xlu0 %257, %v24
    %v259 = vpop.permute.xlu0 %258
    %262 = vset.pattern.permute.xlu0 0
    %263 = vperm.xlu0 %262, %v25
    %v264 = vpop.permute.xlu0 %263
    %267 = vset.pattern.permute.xlu0 0
    %268 = vperm.xlu0 %267, %v26
    %v269 = vpop.permute.xlu0 %268
    %272 = vset.pattern.permute.xlu0 0
    %273 = vperm.xlu0 %272, %v27
    %v274 = vpop.permute.xlu0 %273
    %277 = vset.pattern.permute.xlu0 0
    %278 = vperm.xlu0 %277, %v28
    %v279 = vpop.permute.xlu0 %278
    %282 = vset.pattern.permute.xlu0 0
    %283 = vperm.xlu0 %282, %v29
    %v284 = vpop.permute.xlu0 %283
    %287 = vset.pattern.permute.xlu0 0
    %288 = vperm.xlu0 %287, %v30
    %v289 = vpop.permute.xlu0 %288
    %292 = vset.pattern.permute.xlu0 0
    %293 = vperm.xlu0 %292, %v31
    %v294 = vpop.permute.xlu0 %293
    %297 = vset.pattern.permute.xlu0 0
    %298 = vperm.xlu0 %297, %v32
    %v299 = vpop.permute.xlu0 %298
    %302 = vset.pattern.permute.xlu0 0
    %303 = vperm.xlu0 %302, %v33
    %v304 = vpop.permute.xlu0 %303
    %307 = vset.pattern.permute.xlu0 0
    %308 = vperm.xlu0 %307, %v34
    %v309 = vpop.permute.xlu0 %308
    %312 = vset.pattern.permute.xlu0 0
    %313 = vperm.xlu0 %312, %v35
    %v314 = vpop.permute.xlu0 %313
    %317 = vset.pattern.permute.xlu0 0
    %318 = vperm.xlu0 %317, %v36
    %v319 = vpop.permute.xlu0 %318
    %322 = vset.pattern.permute.xlu0 0
    %323 = vperm.xlu0 %322, %v37
    %v324 = vpop.permute.xlu0 %323
    %327 = vset.pattern.permute.xlu0 0
    %328 = vperm.xlu0 %327, %v38
    %v329 = vpop.permute.xlu0 %328
    %332 = vset.pattern.permute.xlu0 0
    %333 = vperm.xlu0 %332, %v39
    %v334 = vpop.permute.xlu0 %333
    %v336 = vadd.f32 %v259, %v178
    %v337 = vadd.f32 %v264, %v183
    %v338 = vadd.f32 %v269, %v188
    %v339 = vadd.f32 %v274, %v193
    %v340 = vadd.f32 %v279, %v198
    %v341 = vadd.f32 %v284, %v203
    %v342 = vadd.f32 %v289, %v208
    %v343 = vadd.f32 %v294, %v213
    %v344 = vadd.f32 %v299, %v218
    %v345 = vadd.f32 %v304, %v223
    %v346 = vadd.f32 %v309, %v228
    %v347 = vadd.f32 %v314, %v233
    %v348 = vadd.f32 %v319, %v238
    %v349 = vadd.f32 %v324, %v243
    %v350 = vadd.f32 %v329, %v248
    %v351 = vadd.f32 %v334, %v253
    %vm352 = vcmp.eq.s32.totalorder %v22, 1
    %vm353 = vcmp.eq.s32.totalorder %v23, 1
    %v354 = vsel %vm352, 1, 0
    %v355 = vsel %vm353, 1, 0
    %v356 = vcvt.s32.f32 %v354
    %v357 = vcvt.s32.f32 %v355
    %s358 = scalar_lea.vmem %s1, 128
    %v359 = vld [vmem:[%s358] sm:$0xff]
    %v360 = vld [vmem:[%s358 + $0x8] sm:$0xff]
    %v361 = vld [vmem:[%s358 + $0x10] sm:$0xff]
    %v362 = vld [vmem:[%s358 + $0x18] sm:$0xff]
    %v363 = vld [vmem:[%s358 + $0x20] sm:$0xff]
    %v364 = vld [vmem:[%s358 + $0x28] sm:$0xff]
    %v365 = vld [vmem:[%s358 + $0x30] sm:$0xff]
    %v366 = vld [vmem:[%s358 + $0x38] sm:$0xff]
    %v367 = vld [vmem:[%s358 + $0x40] sm:$0xff]
    %v368 = vld [vmem:[%s358 + $0x48] sm:$0xff]
    %v369 = vld [vmem:[%s358 + $0x50] sm:$0xff]
    %v370 = vld [vmem:[%s358 + $0x58] sm:$0xff]
    %v371 = vld [vmem:[%s358 + $0x60] sm:$0xff]
    %v372 = vld [vmem:[%s358 + $0x68] sm:$0xff]
    %v373 = vld [vmem:[%s358 + $0x70] sm:$0xff]
    %v374 = vld [vmem:[%s358 + $0x78] sm:$0xff]
    %v376 = vsel %vm62, %v359, 0
    %v379 = vsel %vm62, %v360, 0
    %v382 = vsel %vm62, %v361, 0
    %v385 = vsel %vm62, %v362, 0
    %v388 = vsel %vm62, %v363, 0
    %v391 = vsel %vm62, %v364, 0
    %v394 = vsel %vm62, %v365, 0
    %v397 = vsel %vm62, %v366, 0
    %v400 = vsel %vm62, %v367, 0
    %v403 = vsel %vm62, %v368, 0
    %v406 = vsel %vm62, %v369, 0
    %v409 = vsel %vm62, %v370, 0
    %v412 = vsel %vm62, %v371, 0
    %v415 = vsel %vm62, %v372, 0
    %v418 = vsel %vm62, %v373, 0
    %v421 = vsel %vm62, %v374, 0
    %423 = vmatprep.subr.mxu0 0.0
    %424 = vmatpush1.msra.mxu0 %v356
    %425 = vmatprep.subr.mxu0 0.0
    %426 = vmatpush1.msra.mxu0 %v357
    %427 = vmatprep.subr.mxu0 0.0
    %428 = vmatpush1.msra.mxu0 0.0
    %429 = vmatprep.subr.mxu0 0.0
    %430 = vmatpush1.msra.mxu0 0.0
    %431 = vmatprep.subr.mxu0 0.0
    %432 = vmatpush1.msra.mxu0 0.0
    %433 = vmatprep.subr.mxu0 0.0
    %434 = vmatpush1.msra.mxu0 0.0
    %435 = vmatprep.subr.mxu0 0.0
    %436 = vmatpush1.msra.mxu0 0.0
    %437 = vmatprep.subr.mxu0 0.0
    %438 = vmatpush1.msra.mxu0 0.0
    %439 = vmatprep.subr.mxu0 0.0
    %440 = vmatpush1.msra.mxu0 0.0
    %441 = vmatprep.subr.mxu0 0.0
    %442 = vmatpush1.msra.mxu0 0.0
    %443 = vmatprep.subr.mxu0 0.0
    %444 = vmatpush1.msra.mxu0 0.0
    %445 = vmatprep.subr.mxu0 0.0
    %446 = vmatpush1.msra.mxu0 0.0
    %447 = vmatprep.subr.mxu0 0.0
    %448 = vmatpush1.msra.mxu0 0.0
    %449 = vmatprep.subr.mxu0 0.0
    %450 = vmatpush1.msra.mxu0 0.0
    %451 = vmatprep.subr.mxu0 0.0
    %452 = vmatpush1.msra.mxu0 0.0
    %453 = vmatprep.subr.mxu0 0.0
    %454 = vmatpush1.msra.mxu0 0.0
    %455 = vmatprep.subr.mxu0 0.0
    %456 = vmatpush1.msra.mxu0 0.0
    %457 = vmatprep.subr.mxu0 0.0
    %458 = vmatpush1.msra.mxu0 0.0
    %459 = vmatprep.subr.mxu0 0.0
    %460 = vmatpush1.msra.mxu0 0.0
    %461 = vmatprep.subr.mxu0 0.0
    %462 = vmatpush1.msra.mxu0 0.0
    %463 = vmatprep.subr.mxu0 0.0
    %464 = vmatpush1.msra.mxu0 0.0
    %465 = vmatprep.subr.mxu0 0.0
    %466 = vmatpush1.msra.mxu0 0.0
    %467 = vmatprep.subr.mxu0 0.0
    %468 = vmatpush1.msra.mxu0 0.0
    %469 = vmatprep.subr.mxu0 0.0
    %470 = vmatpush1.msra.mxu0 0.0
    %471 = vmatprep.subr.mxu0 0.0
    %472 = vmatpush1.msra.mxu0 0.0
    %473 = vmatprep.subr.mxu0 0.0
    %474 = vmatpush1.msra.mxu0 0.0
    %475 = vmatprep.subr.mxu0 0.0
    %476 = vmatpush1.msra.mxu0 0.0
    %477 = vmatprep.subr.mxu0 0.0
    %478 = vmatpush1.msra.mxu0 0.0
    %479 = vmatprep.subr.mxu0 0.0
    %480 = vmatpush1.msra.mxu0 0.0
    %481 = vmatprep.subr.mxu0 0.0
    %482 = vmatpush1.msra.mxu0 0.0
    %483 = vmatprep.subr.mxu0 0.0
    %484 = vmatpush1.msra.mxu0 0.0
    %485 = vmatprep.subr.mxu0 0.0
    %486 = vmatpush1.msra.mxu0 0.0
    %487 = vmatprep.mubr.f32.mxu0 0.0
    %488 = vmatmul.mubr.f32.gmra.mrb[0].mxu0 %v376
    %v489 = vpop.f32.mrb[0].mxu0
    %v490 = vadd.f32 0.0, %v489
    %v491 = vpop.f32.mrb[0].mxu0
    %492 = vmatprep.mubr.f32.mxu0 0.0
    %493 = vmatmul.mubr.f32.gmra.mrb[0].mxu0 %v379
    %v494 = vpop.f32.mrb[0].mxu0
    %v495 = vadd.f32 0.0, %v494
    %v496 = vpop.f32.mrb[0].mxu0
    %497 = vmatprep.mubr.f32.mxu0 0.0
    %498 = vmatmul.mubr.f32.gmra.mrb[0].mxu0 %v382
    %v499 = vpop.f32.mrb[0].mxu0
    %v500 = vadd.f32 0.0, %v499
    %v501 = vpop.f32.mrb[0].mxu0
    %502 = vmatprep.mubr.f32.mxu0 0.0
    %503 = vmatmul.mubr.f32.gmra.mrb[0].mxu0 %v385
    %v504 = vpop.f32.mrb[0].mxu0
    %v505 = vadd.f32 0.0, %v504
    %v506 = vpop.f32.mrb[0].mxu0
    %507 = vmatprep.mubr.f32.mxu0 0.0
    %508 = vmatmul.mubr.f32.gmra.mrb[0].mxu0 %v388
    %v509 = vpop.f32.mrb[0].mxu0
    %v510 = vadd.f32 0.0, %v509
    %v511 = vpop.f32.mrb[0].mxu0
    %512 = vmatprep.mubr.f32.mxu0 0.0
    %513 = vmatmul.mubr.f32.gmra.mrb[0].mxu0 %v391
    %v514 = vpop.f32.mrb[0].mxu0
    %v515 = vadd.f32 0.0, %v514
    %v516 = vpop.f32.mrb[0].mxu0
    %517 = vmatprep.mubr.f32.mxu0 0.0
    %518 = vmatmul.mubr.f32.gmra.mrb[0].mxu0 %v394
    %v519 = vpop.f32.mrb[0].mxu0
    %v520 = vadd.f32 0.0, %v519
    %v521 = vpop.f32.mrb[0].mxu0
    %522 = vmatprep.mubr.f32.mxu0 0.0
    %523 = vmatmul.mubr.f32.gmra.mrb[0].mxu0 %v397
    %v524 = vpop.f32.mrb[0].mxu0
    %v525 = vadd.f32 0.0, %v524
    %v526 = vpop.f32.mrb[0].mxu0
    %527 = vmatprep.mubr.f32.mxu0 0.0
    %528 = vmatmul.mubr.f32.gmra.mrb[0].mxu0 %v400
    %v529 = vpop.f32.mrb[0].mxu0
    %v530 = vadd.f32 0.0, %v529
    %v531 = vpop.f32.mrb[0].mxu0
    %532 = vmatprep.mubr.f32.mxu0 0.0
    %533 = vmatmul.mubr.f32.gmra.mrb[0].mxu0 %v403
    %v534 = vpop.f32.mrb[0].mxu0
    %v535 = vadd.f32 0.0, %v534
    %v536 = vpop.f32.mrb[0].mxu0
    %537 = vmatprep.mubr.f32.mxu0 0.0
    %538 = vmatmul.mubr.f32.gmra.mrb[0].mxu0 %v406
    %v539 = vpop.f32.mrb[0].mxu0
    %v540 = vadd.f32 0.0, %v539
    %v541 = vpop.f32.mrb[0].mxu0
    %542 = vmatprep.mubr.f32.mxu0 0.0
    %543 = vmatmul.mubr.f32.gmra.mrb[0].mxu0 %v409
    %v544 = vpop.f32.mrb[0].mxu0
    %v545 = vadd.f32 0.0, %v544
    %v546 = vpop.f32.mrb[0].mxu0
    %547 = vmatprep.mubr.f32.mxu0 0.0
    %548 = vmatmul.mubr.f32.gmra.mrb[0].mxu0 %v412
    %v549 = vpop.f32.mrb[0].mxu0
    %v550 = vadd.f32 0.0, %v549
    %v551 = vpop.f32.mrb[0].mxu0
    %552 = vmatprep.mubr.f32.mxu0 0.0
    %553 = vmatmul.mubr.f32.gmra.mrb[0].mxu0 %v415
    %v554 = vpop.f32.mrb[0].mxu0
    %v555 = vadd.f32 0.0, %v554
    %v556 = vpop.f32.mrb[0].mxu0
    %557 = vmatprep.mubr.f32.mxu0 0.0
    %558 = vmatmul.mubr.f32.gmra.mrb[0].mxu0 %v418
    %v559 = vpop.f32.mrb[0].mxu0
    %v560 = vadd.f32 0.0, %v559
    %v561 = vpop.f32.mrb[0].mxu0
    %562 = vmatprep.mubr.f32.mxu0 0.0
    %563 = vmatmul.mubr.f32.gmra.mrb[0].mxu0 %v421
    %v564 = vpop.f32.mrb[0].mxu0
    %v565 = vadd.f32 0.0, %v564
    %v566 = vpop.f32.mrb[0].mxu0
    %567 = vdwg.mxu0
    %v568 = vadd.f32 %v336, %v490
    %v569 = vadd.f32 %v337, %v495
    %v570 = vadd.f32 %v338, %v500
    %v571 = vadd.f32 %v339, %v505
    %v572 = vadd.f32 %v340, %v510
    %v573 = vadd.f32 %v341, %v515
    %v574 = vadd.f32 %v342, %v520
    %v575 = vadd.f32 %v343, %v525
    %v576 = vadd.f32 %v344, %v530
    %v577 = vadd.f32 %v345, %v535
    %v578 = vadd.f32 %v346, %v540
    %v579 = vadd.f32 %v347, %v545
    %v580 = vadd.f32 %v348, %v550
    %v581 = vadd.f32 %v349, %v555
    %v582 = vadd.f32 %v350, %v560
    %v583 = vadd.f32 %v351, %v565
    %vm584 = vcmp.eq.s32.totalorder %v22, 2
    %vm585 = vcmp.eq.s32.totalorder %v23, 2
    %v586 = vsel %vm584, 1, 0
    %v587 = vsel %vm585, 1, 0
    %v588 = vcvt.s32.f32 %v586
    %v589 = vcvt.s32.f32 %v587
    %s590 = scalar_lea.vmem %s1, 256
    %v591 = vld [vmem:[%s590] sm:$0xff]
    %v592 = vld [vmem:[%s590 + $0x8] sm:$0xff]
    %v593 = vld [vmem:[%s590 + $0x10] sm:$0xff]
    %v594 = vld [vmem:[%s590 + $0x18] sm:$0xff]
    %v595 = vld [vmem:[%s590 + $0x20] sm:$0xff]
    %v596 = vld [vmem:[%s590 + $0x28] sm:$0xff]
    %v597 = vld [vmem:[%s590 + $0x30] sm:$0xff]
    %v598 = vld [vmem:[%s590 + $0x38] sm:$0xff]
    %v599 = vld [vmem:[%s590 + $0x40] sm:$0xff]
    %v600 = vld [vmem:[%s590 + $0x48] sm:$0xff]
    %v601 = vld [vmem:[%s590 + $0x50] sm:$0xff]
    %v602 = vld [vmem:[%s590 + $0x58] sm:$0xff]
    %v603 = vld [vmem:[%s590 + $0x60] sm:$0xff]
    %v604 = vld [vmem:[%s590 + $0x68] sm:$0xff]
    %v605 = vld [vmem:[%s590 + $0x70] sm:$0xff]
    %v606 = vld [vmem:[%s590 + $0x78] sm:$0xff]
    %v608 = vsel %vm62, %v591, 0
    %v611 = vsel %vm62, %v592, 0
    %v614 = vsel %vm62, %v593, 0
    %v617 = vsel %vm62, %v594, 0
    %v620 = vsel %vm62, %v595, 0
    %v623 = vsel %vm62, %v596, 0
    %v626 = vsel %vm62, %v597, 0
    %v629 = vsel %vm62, %v598, 0
    %v632 = vsel %vm62, %v599, 0
    %v635 = vsel %vm62, %v600, 0
    %v638 = vsel %vm62, %v601, 0
    %v641 = vsel %vm62, %v602, 0
    %v644 = vsel %vm62, %v603, 0
    %v647 = vsel %vm62, %v604, 0
    %v650 = vsel %vm62, %v605, 0
    %v653 = vsel %vm62, %v606, 0
    %655 = vmatprep.subr.mxu0 0.0
    %656 = vmatpush1.msra.mxu0 %v588
    %657 = vmatprep.subr.mxu0 0.0
    %658 = vmatpush1.msra.mxu0 %v589
    %659 = vmatprep.subr.mxu0 0.0
    %660 = vmatpush1.msra.mxu0 0.0
    %661 = vmatprep.subr.mxu0 0.0
    %662 = vmatpush1.msra.mxu0 0.0
    %663 = vmatprep.subr.mxu0 0.0
    %664 = vmatpush1.msra.mxu0 0.0
    %665 = vmatprep.subr.mxu0 0.0
    %666 = vmatpush1.msra.mxu0 0.0
    %667 = vmatprep.subr.mxu0 0.0
    %668 = vmatpush1.msra.mxu0 0.0
    %669 = vmatprep.subr.mxu0 0.0
    %670 = vmatpush1.msra.mxu0 0.0
    %671 = vmatprep.subr.mxu0 0.0
    %672 = vmatpush1.msra.mxu0 0.0
    %673 = vmatprep.subr.mxu0 0.0
    %674 = vmatpush1.msra.mxu0 0.0
    %675 = vmatprep.subr.mxu0 0.0
    %676 = vmatpush1.msra.mxu0 0.0
    %677 = vmatprep.subr.mxu0 0.0
    %678 = vmatpush1.msra.mxu0 0.0
    %679 = vmatprep.subr.mxu0 0.0
    %680 = vmatpush1.msra.mxu0 0.0
    %681 = vmatprep.subr.mxu0 0.0
    %682 = vmatpush1.msra.mxu0 0.0
    %683 = vmatprep.subr.mxu0 0.0
    %684 = vmatpush1.msra.mxu0 0.0
    %685 = vmatprep.subr.mxu0 0.0
    %686 = vmatpush1.msra.mxu0 0.0
    %687 = vmatprep.subr.mxu0 0.0
    %688 = vmatpush1.msra.mxu0 0.0
    %689 = vmatprep.subr.mxu0 0.0
    %690 = vmatpush1.msra.mxu0 0.0
    %691 = vmatprep.subr.mxu0 0.0
    %692 = vmatpush1.msra.mxu0 0.0
    %693 = vmatprep.subr.mxu0 0.0
    %694 = vmatpush1.msra.mxu0 0.0
    %695 = vmatprep.subr.mxu0 0.0
    %696 = vmatpush1.msra.mxu0 0.0
    %697 = vmatprep.subr.mxu0 0.0
    %698 = vmatpush1.msra.mxu0 0.0
    %699 = vmatprep.subr.mxu0 0.0
    %700 = vmatpush1.msra.mxu0 0.0
    %701 = vmatprep.subr.mxu0 0.0
    %702 = vmatpush1.msra.mxu0 0.0
    %703 = vmatprep.subr.mxu0 0.0
    %704 = vmatpush1.msra.mxu0 0.0
    %705 = vmatprep.subr.mxu0 0.0
    %706 = vmatpush1.msra.mxu0 0.0
    %707 = vmatprep.subr.mxu0 0.0
    %708 = vmatpush1.msra.mxu0 0.0
    %709 = vmatprep.subr.mxu0 0.0
    %710 = vmatpush1.msra.mxu0 0.0
    %711 = vmatprep.subr.mxu0 0.0
    %712 = vmatpush1.msra.mxu0 0.0
    %713 = vmatprep.subr.mxu0 0.0
    %714 = vmatpush1.msra.mxu0 0.0
    %715 = vmatprep.subr.mxu0 0.0
    %716 = vmatpush1.msra.mxu0 0.0
    %717 = vmatprep.subr.mxu0 0.0
    %718 = vmatpush1.msra.mxu0 0.0
    %719 = vmatprep.mubr.f32.mxu0 0.0
    %720 = vmatmul.mubr.f32.gmra.mrb[0].mxu0 %v608
    %v721 = vpop.f32.mrb[0].mxu0
    %v722 = vadd.f32 0.0, %v721
    %v723 = vpop.f32.mrb[0].mxu0
    %724 = vmatprep.mubr.f32.mxu0 0.0
    %725 = vmatmul.mubr.f32.gmra.mrb[0].mxu0 %v611
    %v726 = vpop.f32.mrb[0].mxu0
    %v727 = vadd.f32 0.0, %v726
    %v728 = vpop.f32.mrb[0].mxu0
    %729 = vmatprep.mubr.f32.mxu0 0.0
    %730 = vmatmul.mubr.f32.gmra.mrb[0].mxu0 %v614
    %v731 = vpop.f32.mrb[0].mxu0
    %v732 = vadd.f32 0.0, %v731
    %v733 = vpop.f32.mrb[0].mxu0
    %734 = vmatprep.mubr.f32.mxu0 0.0
    %735 = vmatmul.mubr.f32.gmra.mrb[0].mxu0 %v617
    %v736 = vpop.f32.mrb[0].mxu0
    %v737 = vadd.f32 0.0, %v736
    %v738 = vpop.f32.mrb[0].mxu0
    %739 = vmatprep.mubr.f32.mxu0 0.0
    %740 = vmatmul.mubr.f32.gmra.mrb[0].mxu0 %v620
    %v741 = vpop.f32.mrb[0].mxu0
    %v742 = vadd.f32 0.0, %v741
    %v743 = vpop.f32.mrb[0].mxu0
    %744 = vmatprep.mubr.f32.mxu0 0.0
    %745 = vmatmul.mubr.f32.gmra.mrb[0].mxu0 %v623
    %v746 = vpop.f32.mrb[0].mxu0
    %v747 = vadd.f32 0.0, %v746
    %v748 = vpop.f32.mrb[0].mxu0
    %749 = vmatprep.mubr.f32.mxu0 0.0
    %750 = vmatmul.mubr.f32.gmra.mrb[0].mxu0 %v626
    %v751 = vpop.f32.mrb[0].mxu0
    %v752 = vadd.f32 0.0, %v751
    %v753 = vpop.f32.mrb[0].mxu0
    %754 = vmatprep.mubr.f32.mxu0 0.0
    %755 = vmatmul.mubr.f32.gmra.mrb[0].mxu0 %v629
    %v756 = vpop.f32.mrb[0].mxu0
    %v757 = vadd.f32 0.0, %v756
    %v758 = vpop.f32.mrb[0].mxu0
    %759 = vmatprep.mubr.f32.mxu0 0.0
    %760 = vmatmul.mubr.f32.gmra.mrb[0].mxu0 %v632
    %v761 = vpop.f32.mrb[0].mxu0
    %v762 = vadd.f32 0.0, %v761
    %v763 = vpop.f32.mrb[0].mxu0
    %764 = vmatprep.mubr.f32.mxu0 0.0
    %765 = vmatmul.mubr.f32.gmra.mrb[0].mxu0 %v635
    %v766 = vpop.f32.mrb[0].mxu0
    %v767 = vadd.f32 0.0, %v766
    %v768 = vpop.f32.mrb[0].mxu0
    %769 = vmatprep.mubr.f32.mxu0 0.0
    %770 = vmatmul.mubr.f32.gmra.mrb[0].mxu0 %v638
    %v771 = vpop.f32.mrb[0].mxu0
    %v772 = vadd.f32 0.0, %v771
    %v773 = vpop.f32.mrb[0].mxu0
    %774 = vmatprep.mubr.f32.mxu0 0.0
    %775 = vmatmul.mubr.f32.gmra.mrb[0].mxu0 %v641
    %v776 = vpop.f32.mrb[0].mxu0
    %v777 = vadd.f32 0.0, %v776
    %v778 = vpop.f32.mrb[0].mxu0
    %779 = vmatprep.mubr.f32.mxu0 0.0
    %780 = vmatmul.mubr.f32.gmra.mrb[0].mxu0 %v644
    %v781 = vpop.f32.mrb[0].mxu0
    %v782 = vadd.f32 0.0, %v781
    %v783 = vpop.f32.mrb[0].mxu0
    %784 = vmatprep.mubr.f32.mxu0 0.0
    %785 = vmatmul.mubr.f32.gmra.mrb[0].mxu0 %v647
    %v786 = vpop.f32.mrb[0].mxu0
    %v787 = vadd.f32 0.0, %v786
    %v788 = vpop.f32.mrb[0].mxu0
    %789 = vmatprep.mubr.f32.mxu0 0.0
    %790 = vmatmul.mubr.f32.gmra.mrb[0].mxu0 %v650
    %v791 = vpop.f32.mrb[0].mxu0
    %v792 = vadd.f32 0.0, %v791
    %v793 = vpop.f32.mrb[0].mxu0
    %794 = vmatprep.mubr.f32.mxu0 0.0
    %795 = vmatmul.mubr.f32.gmra.mrb[0].mxu0 %v653
    %v796 = vpop.f32.mrb[0].mxu0
    %v797 = vadd.f32 0.0, %v796
    %v798 = vpop.f32.mrb[0].mxu0
    %799 = vdwg.mxu0
    %v800 = vadd.f32 %v568, %v722
    %v801 = vadd.f32 %v569, %v727
    %v802 = vadd.f32 %v570, %v732
    %v803 = vadd.f32 %v571, %v737
    %v804 = vadd.f32 %v572, %v742
    %v805 = vadd.f32 %v573, %v747
    %v806 = vadd.f32 %v574, %v752
    %v807 = vadd.f32 %v575, %v757
    %v808 = vadd.f32 %v576, %v762
    %v809 = vadd.f32 %v577, %v767
    %v810 = vadd.f32 %v578, %v772
    %v811 = vadd.f32 %v579, %v777
    %v812 = vadd.f32 %v580, %v782
    %v813 = vadd.f32 %v581, %v787
    %v814 = vadd.f32 %v582, %v792
    %v815 = vadd.f32 %v583, %v797
    %vm816 = vcmp.eq.s32.totalorder %v22, 3
    %vm817 = vcmp.eq.s32.totalorder %v23, 3
    %v818 = vsel %vm816, 1, 0
    %v819 = vsel %vm817, 1, 0
    %v820 = vcvt.s32.f32 %v818
    %v821 = vcvt.s32.f32 %v819
    %s822 = scalar_lea.vmem %s1, 384
    %v823 = vld [vmem:[%s822] sm:$0xff]
    %v824 = vld [vmem:[%s822 + $0x8] sm:$0xff]
    %v825 = vld [vmem:[%s822 + $0x10] sm:$0xff]
    %v826 = vld [vmem:[%s822 + $0x18] sm:$0xff]
    %v827 = vld [vmem:[%s822 + $0x20] sm:$0xff]
    %v828 = vld [vmem:[%s822 + $0x28] sm:$0xff]
    %v829 = vld [vmem:[%s822 + $0x30] sm:$0xff]
    %v830 = vld [vmem:[%s822 + $0x38] sm:$0xff]
    %v831 = vld [vmem:[%s822 + $0x40] sm:$0xff]
    %v832 = vld [vmem:[%s822 + $0x48] sm:$0xff]
    %v833 = vld [vmem:[%s822 + $0x50] sm:$0xff]
    %v834 = vld [vmem:[%s822 + $0x58] sm:$0xff]
    %v835 = vld [vmem:[%s822 + $0x60] sm:$0xff]
    %v836 = vld [vmem:[%s822 + $0x68] sm:$0xff]
    %v837 = vld [vmem:[%s822 + $0x70] sm:$0xff]
    %v838 = vld [vmem:[%s822 + $0x78] sm:$0xff]
    %v840 = vsel %vm62, %v823, 0
    %v843 = vsel %vm62, %v824, 0
    %v846 = vsel %vm62, %v825, 0
    %v849 = vsel %vm62, %v826, 0
    %v852 = vsel %vm62, %v827, 0
    %v855 = vsel %vm62, %v828, 0
    %v858 = vsel %vm62, %v829, 0
    %v861 = vsel %vm62, %v830, 0
    %v864 = vsel %vm62, %v831, 0
    %v867 = vsel %vm62, %v832, 0
    %v870 = vsel %vm62, %v833, 0
    %v873 = vsel %vm62, %v834, 0
    %v876 = vsel %vm62, %v835, 0
    %v879 = vsel %vm62, %v836, 0
    %v882 = vsel %vm62, %v837, 0
    %v885 = vsel %vm62, %v838, 0
    %887 = vmatprep.subr.mxu0 0.0
    %888 = vmatpush1.msra.mxu0 %v820
    %889 = vmatprep.subr.mxu0 0.0
    %890 = vmatpush1.msra.mxu0 %v821
    %891 = vmatprep.subr.mxu0 0.0
    %892 = vmatpush1.msra.mxu0 0.0
    %893 = vmatprep.subr.mxu0 0.0
    %894 = vmatpush1.msra.mxu0 0.0
    %895 = vmatprep.subr.mxu0 0.0
    %896 = vmatpush1.msra.mxu0 0.0
    %897 = vmatprep.subr.mxu0 0.0
    %898 = vmatpush1.msra.mxu0 0.0
    %899 = vmatprep.subr.mxu0 0.0
    %900 = vmatpush1.msra.mxu0 0.0
    %901 = vmatprep.subr.mxu0 0.0
    %902 = vmatpush1.msra.mxu0 0.0
    %903 = vmatprep.subr.mxu0 0.0
    %904 = vmatpush1.msra.mxu0 0.0
    %905 = vmatprep.subr.mxu0 0.0
    %906 = vmatpush1.msra.mxu0 0.0
    %907 = vmatprep.subr.mxu0 0.0
    %908 = vmatpush1.msra.mxu0 0.0
    %909 = vmatprep.subr.mxu0 0.0
    %910 = vmatpush1.msra.mxu0 0.0
    %911 = vmatprep.subr.mxu0 0.0
    %912 = vmatpush1.msra.mxu0 0.0
    %913 = vmatprep.subr.mxu0 0.0
    %914 = vmatpush1.msra.mxu0 0.0
    %915 = vmatprep.subr.mxu0 0.0
    %916 = vmatpush1.msra.mxu0 0.0
    %917 = vmatprep.subr.mxu0 0.0
    %918 = vmatpush1.msra.mxu0 0.0
    %919 = vmatprep.subr.mxu0 0.0
    %920 = vmatpush1.msra.mxu0 0.0
    %921 = vmatprep.subr.mxu0 0.0
    %922 = vmatpush1.msra.mxu0 0.0
    %923 = vmatprep.subr.mxu0 0.0
    %924 = vmatpush1.msra.mxu0 0.0
    %925 = vmatprep.subr.mxu0 0.0
    %926 = vmatpush1.msra.mxu0 0.0
    %927 = vmatprep.subr.mxu0 0.0
    %928 = vmatpush1.msra.mxu0 0.0
    %929 = vmatprep.subr.mxu0 0.0
    %930 = vmatpush1.msra.mxu0 0.0
    %931 = vmatprep.subr.mxu0 0.0
    %932 = vmatpush1.msra.mxu0 0.0
    %933 = vmatprep.subr.mxu0 0.0
    %934 = vmatpush1.msra.mxu0 0.0
    %935 = vmatprep.subr.mxu0 0.0
    %936 = vmatpush1.msra.mxu0 0.0
    %937 = vmatprep.subr.mxu0 0.0
    %938 = vmatpush1.msra.mxu0 0.0
    %939 = vmatprep.subr.mxu0 0.0
    %940 = vmatpush1.msra.mxu0 0.0
    %941 = vmatprep.subr.mxu0 0.0
    %942 = vmatpush1.msra.mxu0 0.0
    %943 = vmatprep.subr.mxu0 0.0
    %944 = vmatpush1.msra.mxu0 0.0
    %945 = vmatprep.subr.mxu0 0.0
    %946 = vmatpush1.msra.mxu0 0.0
    %947 = vmatprep.subr.mxu0 0.0
    %948 = vmatpush1.msra.mxu0 0.0
    %949 = vmatprep.subr.mxu0 0.0
    %950 = vmatpush1.msra.mxu0 0.0
    %951 = vmatprep.mubr.f32.mxu0 0.0
    %952 = vmatmul.mubr.f32.gmra.mrb[0].mxu0 %v840
    %v953 = vpop.f32.mrb[0].mxu0
    %v954 = vadd.f32 0.0, %v953
    %v955 = vpop.f32.mrb[0].mxu0
    %956 = vmatprep.mubr.f32.mxu0 0.0
    %957 = vmatmul.mubr.f32.gmra.mrb[0].mxu0 %v843
    %v958 = vpop.f32.mrb[0].mxu0
    %v959 = vadd.f32 0.0, %v958
    %v960 = vpop.f32.mrb[0].mxu0
    %961 = vmatprep.mubr.f32.mxu0 0.0
    %962 = vmatmul.mubr.f32.gmra.mrb[0].mxu0 %v846
    %v963 = vpop.f32.mrb[0].mxu0
    %v964 = vadd.f32 0.0, %v963
    %v965 = vpop.f32.mrb[0].mxu0
    %966 = vmatprep.mubr.f32.mxu0 0.0
    %967 = vmatmul.mubr.f32.gmra.mrb[0].mxu0 %v849
    %v968 = vpop.f32.mrb[0].mxu0
    %v969 = vadd.f32 0.0, %v968
    %v970 = vpop.f32.mrb[0].mxu0
    %971 = vmatprep.mubr.f32.mxu0 0.0
    %972 = vmatmul.mubr.f32.gmra.mrb[0].mxu0 %v852
    %v973 = vpop.f32.mrb[0].mxu0
    %v974 = vadd.f32 0.0, %v973
    %v975 = vpop.f32.mrb[0].mxu0
    %976 = vmatprep.mubr.f32.mxu0 0.0
    %977 = vmatmul.mubr.f32.gmra.mrb[0].mxu0 %v855
    %v978 = vpop.f32.mrb[0].mxu0
    %v979 = vadd.f32 0.0, %v978
    %v980 = vpop.f32.mrb[0].mxu0
    %981 = vmatprep.mubr.f32.mxu0 0.0
    %982 = vmatmul.mubr.f32.gmra.mrb[0].mxu0 %v858
    %v983 = vpop.f32.mrb[0].mxu0
    %v984 = vadd.f32 0.0, %v983
    %v985 = vpop.f32.mrb[0].mxu0
    %986 = vmatprep.mubr.f32.mxu0 0.0
    %987 = vmatmul.mubr.f32.gmra.mrb[0].mxu0 %v861
    %v988 = vpop.f32.mrb[0].mxu0
    %v989 = vadd.f32 0.0, %v988
    %v990 = vpop.f32.mrb[0].mxu0
    %991 = vmatprep.mubr.f32.mxu0 0.0
    %992 = vmatmul.mubr.f32.gmra.mrb[0].mxu0 %v864
    %v993 = vpop.f32.mrb[0].mxu0
    %v994 = vadd.f32 0.0, %v993
    %v995 = vpop.f32.mrb[0].mxu0
    %996 = vmatprep.mubr.f32.mxu0 0.0
    %997 = vmatmul.mubr.f32.gmra.mrb[0].mxu0 %v867
    %v998 = vpop.f32.mrb[0].mxu0
    %v999 = vadd.f32 0.0, %v998
    %v1000 = vpop.f32.mrb[0].mxu0
    %1001 = vmatprep.mubr.f32.mxu0 0.0
    %1002 = vmatmul.mubr.f32.gmra.mrb[0].mxu0 %v870
    %v1003 = vpop.f32.mrb[0].mxu0
    %v1004 = vadd.f32 0.0, %v1003
    %v1005 = vpop.f32.mrb[0].mxu0
    %1006 = vmatprep.mubr.f32.mxu0 0.0
    %1007 = vmatmul.mubr.f32.gmra.mrb[0].mxu0 %v873
    %v1008 = vpop.f32.mrb[0].mxu0
    %v1009 = vadd.f32 0.0, %v1008
    %v1010 = vpop.f32.mrb[0].mxu0
    %1011 = vmatprep.mubr.f32.mxu0 0.0
    %1012 = vmatmul.mubr.f32.gmra.mrb[0].mxu0 %v876
    %v1013 = vpop.f32.mrb[0].mxu0
    %v1014 = vadd.f32 0.0, %v1013
    %v1015 = vpop.f32.mrb[0].mxu0
    %1016 = vmatprep.mubr.f32.mxu0 0.0
    %1017 = vmatmul.mubr.f32.gmra.mrb[0].mxu0 %v879
    %v1018 = vpop.f32.mrb[0].mxu0
    %v1019 = vadd.f32 0.0, %v1018
    %v1020 = vpop.f32.mrb[0].mxu0
    %1021 = vmatprep.mubr.f32.mxu0 0.0
    %1022 = vmatmul.mubr.f32.gmra.mrb[0].mxu0 %v882
    %v1023 = vpop.f32.mrb[0].mxu0
    %v1024 = vadd.f32 0.0, %v1023
    %v1025 = vpop.f32.mrb[0].mxu0
    %1026 = vmatprep.mubr.f32.mxu0 0.0
    %1027 = vmatmul.mubr.f32.gmra.mrb[0].mxu0 %v885
    %v1028 = vpop.f32.mrb[0].mxu0
    %v1029 = vadd.f32 0.0, %v1028
    %v1030 = vpop.f32.mrb[0].mxu0
    %1031 = vdwg.mxu0
    %v1032 = vadd.f32 %v800, %v954
    %v1033 = vadd.f32 %v801, %v959
    %v1034 = vadd.f32 %v802, %v964
    %v1035 = vadd.f32 %v803, %v969
    %v1036 = vadd.f32 %v804, %v974
    %v1037 = vadd.f32 %v805, %v979
    %v1038 = vadd.f32 %v806, %v984
    %v1039 = vadd.f32 %v807, %v989
    %v1040 = vadd.f32 %v808, %v994
    %v1041 = vadd.f32 %v809, %v999
    %v1042 = vadd.f32 %v810, %v1004
    %v1043 = vadd.f32 %v811, %v1009
    %v1044 = vadd.f32 %v812, %v1014
    %v1045 = vadd.f32 %v813, %v1019
    %v1046 = vadd.f32 %v814, %v1024
    %v1047 = vadd.f32 %v815, %v1029
    %v1048 = vmax.f32 %v1032, 0.0
    %v1049 = vmax.f32 %v1033, 0.0
    %v1050 = vmax.f32 %v1034, 0.0
    %v1051 = vmax.f32 %v1035, 0.0
    %v1052 = vmax.f32 %v1036, 0.0
    %v1053 = vmax.f32 %v1037, 0.0
    %v1054 = vmax.f32 %v1038, 0.0
    %v1055 = vmax.f32 %v1039, 0.0
    %v1056 = vmax.f32 %v1040, 0.0
    %v1057 = vmax.f32 %v1041, 0.0
    %v1058 = vmax.f32 %v1042, 0.0
    %v1059 = vmax.f32 %v1043, 0.0
    %v1060 = vmax.f32 %v1044, 0.0
    %v1061 = vmax.f32 %v1045, 0.0
    %v1062 = vmax.f32 %v1046, 0.0
    %v1063 = vmax.f32 %v1047, 0.0
    %v1064 = vld [vmem:[%s3] sm:$0xff]
    %v1065 = vld [vmem:[%s3 + $0x8] sm:$0xff]
    %v1066 = vld [vmem:[%s3 + $0x10] sm:$0xff]
    %v1067 = vld [vmem:[%s3 + $0x18] sm:$0xff]
    %v1068 = vld [vmem:[%s3 + $0x20] sm:$0xff]
    %v1069 = vld [vmem:[%s3 + $0x28] sm:$0xff]
    %v1070 = vld [vmem:[%s3 + $0x30] sm:$0xff]
    %v1071 = vld [vmem:[%s3 + $0x38] sm:$0xff]
    %v1072 = vld [vmem:[%s3 + $0x40] sm:$0xff]
    %v1073 = vld [vmem:[%s3 + $0x48] sm:$0xff]
    %v1074 = vld [vmem:[%s3 + $0x50] sm:$0xff]
    %v1075 = vld [vmem:[%s3 + $0x58] sm:$0xff]
    %v1076 = vld [vmem:[%s3 + $0x60] sm:$0xff]
    %v1077 = vld [vmem:[%s3 + $0x68] sm:$0xff]
    %v1078 = vld [vmem:[%s3 + $0x70] sm:$0xff]
    %v1079 = vld [vmem:[%s3 + $0x78] sm:$0xff]
    %1081 = vset.pattern.permute.xlu0 0
    %1082 = vperm.xlu0 %1081, %v1064
    %v1083 = vpop.permute.xlu0 %1082
    %1086 = vset.pattern.permute.xlu0 0
    %1087 = vperm.xlu0 %1086, %v1065
    %v1088 = vpop.permute.xlu0 %1087
    %1091 = vset.pattern.permute.xlu0 0
    %1092 = vperm.xlu0 %1091, %v1066
    %v1093 = vpop.permute.xlu0 %1092
    %1096 = vset.pattern.permute.xlu0 0
    %1097 = vperm.xlu0 %1096, %v1067
    %v1098 = vpop.permute.xlu0 %1097
    %1101 = vset.pattern.permute.xlu0 0
    %1102 = vperm.xlu0 %1101, %v1068
    %v1103 = vpop.permute.xlu0 %1102
    %1106 = vset.pattern.permute.xlu0 0
    %1107 = vperm.xlu0 %1106, %v1069
    %v1108 = vpop.permute.xlu0 %1107
    %1111 = vset.pattern.permute.xlu0 0
    %1112 = vperm.xlu0 %1111, %v1070
    %v1113 = vpop.permute.xlu0 %1112
    %1116 = vset.pattern.permute.xlu0 0
    %1117 = vperm.xlu0 %1116, %v1071
    %v1118 = vpop.permute.xlu0 %1117
    %1121 = vset.pattern.permute.xlu0 0
    %1122 = vperm.xlu0 %1121, %v1072
    %v1123 = vpop.permute.xlu0 %1122
    %1126 = vset.pattern.permute.xlu0 0
    %1127 = vperm.xlu0 %1126, %v1073
    %v1128 = vpop.permute.xlu0 %1127
    %1131 = vset.pattern.permute.xlu0 0
    %1132 = vperm.xlu0 %1131, %v1074
    %v1133 = vpop.permute.xlu0 %1132
    %1136 = vset.pattern.permute.xlu0 0
    %1137 = vperm.xlu0 %1136, %v1075
    %v1138 = vpop.permute.xlu0 %1137
    %1141 = vset.pattern.permute.xlu0 0
    %1142 = vperm.xlu0 %1141, %v1076
    %v1143 = vpop.permute.xlu0 %1142
    %1146 = vset.pattern.permute.xlu0 0
    %1147 = vperm.xlu0 %1146, %v1077
    %v1148 = vpop.permute.xlu0 %1147
    %1151 = vset.pattern.permute.xlu0 0
    %1152 = vperm.xlu0 %1151, %v1078
    %v1153 = vpop.permute.xlu0 %1152
    %1156 = vset.pattern.permute.xlu0 0
    %1157 = vperm.xlu0 %1156, %v1079
    %v1158 = vpop.permute.xlu0 %1157
    %v1160 = vmul.f32 %v1048, %v1083
    %v1161 = vmul.f32 %v1049, %v1088
    %v1162 = vmul.f32 %v1050, %v1093
    %v1163 = vmul.f32 %v1051, %v1098
    %v1164 = vmul.f32 %v1052, %v1103
    %v1165 = vmul.f32 %v1053, %v1108
    %v1166 = vmul.f32 %v1054, %v1113
    %v1167 = vmul.f32 %v1055, %v1118
    %v1168 = vmul.f32 %v1056, %v1123
    %v1169 = vmul.f32 %v1057, %v1128
    %v1170 = vmul.f32 %v1058, %v1133
    %v1171 = vmul.f32 %v1059, %v1138
    %v1172 = vmul.f32 %v1060, %v1143
    %v1173 = vmul.f32 %v1061, %v1148
    %v1174 = vmul.f32 %v1062, %v1153
    %v1175 = vmul.f32 %v1063, %v1158
    %v1176 = vadd.f32 %v1160, %v1161
    %v1177 = vadd.f32 %v1176, %v1162
    %v1178 = vadd.f32 %v1177, %v1163
    %v1179 = vadd.f32 %v1178, %v1164
    %v1180 = vadd.f32 %v1179, %v1165
    %v1181 = vadd.f32 %v1180, %v1166
    %v1182 = vadd.f32 %v1181, %v1167
    %v1183 = vadd.f32 %v1182, %v1168
    %v1184 = vadd.f32 %v1183, %v1169
    %v1185 = vadd.f32 %v1184, %v1170
    %v1186 = vadd.f32 %v1185, %v1171
    %v1187 = vadd.f32 %v1186, %v1172
    %v1188 = vadd.f32 %v1187, %v1173
    %v1189 = vadd.f32 %v1188, %v1174
    %v1190 = vadd.f32 %v1189, %v1175
    %v1191 = vrot.slane %v1190, 4
    %v1192 = vadd.f32 %v1190, %v1191
    %v1193 = vrot.slane %v1192, 2
    %v1194 = vadd.f32 %v1192, %v1193
    %v1195 = vrot.slane %v1194, 1
    %v1196 = vadd.f32 %v1194, %v1195
    %s1197 = sld [smem:[#allocation2]]
    %v1198 = vstv %s1197
    %v1199 = vadd.f32 %v1196, %v1198
    %1200 = vst [vmem:[#allocation3] sm:$0x1] %v1199
    // Predicated region
    $region22: #{tpu_custom_call.1} parent=1 // pred_check
      _
    $region23: #{tpu_custom_call.1} parent=1 // pred_check_branch
      %1202 = sbr.rel (0) target = $region25
    $region24: #{tpu_custom_call.1} parent=1 // pred_region
      %s1204 = ssub.s32 16, 16
      %1205 = vsyncadd [#allocation4], %s1204
      %s1207 = sshll.u32 [#allocation3], 4
      %s1208 = int_to_ptr.vmem [resolvable:$true] %s1207
      %1210 = dma.vmem_to_hbm [thread:$0]  %s1208, 16, %s5, [#allocation4]
    $region25: #{tpu_custom_call.1} parent=1 // pred_fallthru
      _
    // Predicated region
    $region26: #{tpu_custom_call.1} parent=1 // pred_check
      _
    $region27: #{tpu_custom_call.1} parent=1 // pred_check_branch
      %1212 = sbr.rel (0) target = $region29
    $region28: #{tpu_custom_call.1} parent=1 // pred_region
      %1213 = dma.done [#allocation4], 16
    $region29: #{tpu_custom_call.1} parent=1 // pred_fallthru
      _
    %1214 = vsyncpa [#allocation4], 1

</llo_original>
